<compile_context>
chip_gen: v7x
topology: tpu7x:2x2x1
jax: 0.10.0
libtpu: 0.0.40
codegen_flags: <defaults>
</compile_context>

<pallas_src>
import functools
import math

import jax
import jax.numpy as jnp
from jax.experimental import pallas as pl
from jax.experimental.pallas import tpu as pltpu


_TARGET_TILE_IN_BYTES = 4 * 1024 * 1024  # ~4 MiB of input per pipelined grid step


# ---------------------------------------------------------------------------
# Kernels
# ---------------------------------------------------------------------------
def _ln_lane_kernel(x_ref, gamma_ref, beta_ref, o_ref, *, eps, feat):
    """General path: one tile row == one LayerNorm row (features span the lanes)."""
    x = x_ref[...].astype(jnp.float32)                       # (TM, F)
    mean = jnp.mean(x, axis=-1, keepdims=True)
    diff = x - mean
    # torch.Tensor.var default: unbiased (divide by N-1).  feat == 1 -> 0/0 -> NaN,
    # which matches torch's behaviour.
    var = jnp.sum(diff * diff, axis=-1, keepdims=True) / jnp.float32(feat - 1)
    inv_std = jax.lax.rsqrt(var + jnp.float32(eps))
    y = diff * inv_std * gamma_ref[...].astype(jnp.float32) \
        + beta_ref[...].astype(jnp.float32)
    o_ref[...] = y.astype(o_ref.dtype)


def _ln_folded_kernel(x_ref, gamma_ref, beta_ref, segb_ref, o_ref, *, eps, feat):
    """Lane-dense path: each tile row packs g = lane_width//feat original rows.

    Segmented mean / sum-of-squares over contiguous `feat`-lane chunks is computed
    with a block-diagonal ones matrix (resident input, built once in the wrapper)
    on the otherwise idle MXU: dot(x, segb) = per-segment sum broadcast in place.
    """
    x = x_ref[...].astype(jnp.float32)                       # (TM, L), L = g*feat
    segb = segb_ref[...]                                     # (L, L) resident
    sum_b = jnp.dot(x, segb, preferred_element_type=jnp.float32)
    mean_b = sum_b / jnp.float32(feat)
    diff = x - mean_b
    sq_b = jnp.dot(diff * diff, segb, preferred_element_type=jnp.float32)
    var_b = sq_b / jnp.float32(feat - 1)                     # unbiased, like torch.var
    inv_std = jax.lax.rsqrt(var_b + jnp.float32(eps))
    y = diff * inv_std * gamma_ref[...].astype(jnp.float32) \
        + beta_ref[...].astype(jnp.float32)
    o_ref[...] = y.astype(o_ref.dtype)


def _ln_axis2_kernel(x_ref, gamma_ref, beta_ref, o_ref, *, eps, feat):
    """dim != -1 path: normalize over axis=-2 (sublane reduce), minor axis stays on
    the lanes, so no HBM transpose is needed."""
    x = x_ref[...].astype(jnp.float32)                       # (TB, C, L)
    mean = jnp.mean(x, axis=-2, keepdims=True)               # (TB, 1, L)
    diff = x - mean
    var = jnp.sum(diff * diff, axis=-2, keepdims=True) / jnp.float32(feat - 1)
    inv_std = jax.lax.rsqrt(var + jnp.float32(eps))
    gamma = gamma_ref[...].astype(jnp.float32)                # (C, 1) -> lane broadcast
    beta = beta_ref[...].astype(jnp.float32)
    y = diff * inv_std * gamma + beta
    o_ref[...] = y.astype(o_ref.dtype)


# ---------------------------------------------------------------------------
# Tiling helpers
# ---------------------------------------------------------------------------
def _vmem_budget():
    """Generation-aware VMEM limits (128 MiB on v5e/v6e, 64 MiB per core on v7x)."""
    try:
        cap = int(getattr(pltpu.get_tpu_info(), "vmem_capacity_bytes"))
    except Exception:
        cap = 64 * 1024 * 1024        # conservative (v7x per-TensorCore) fallback
    vmem_limit = min(cap * 3 // 4, 96 * 1024 * 1024)
    vmem_limit = max(vmem_limit, 32 * 1024 * 1024)
    tile_budget = vmem_limit * 4 // 5  # headroom for gamma/beta/segb + compiler scratch
    return vmem_limit, tile_budget


def _pick_row_tile(rows, lane_width, dtype_bytes, tile_budget):
    """Row tile targeting ~4 MiB of input per step, capped by the VMEM budget."""
    tm_target = _TARGET_TILE_IN_BYTES // max(1, lane_width * dtype_bytes)
    # Per-row VMEM: double-buffered in + out tiles (I/O dtype) plus ~4 f32 temporaries
    # (x, diff, y, ...) that are NOT double-buffered.
    per_row_vmem = 2 * 2 * lane_width * dtype_bytes + 4 * lane_width * 4
    tm = min(tm_target, tile_budget // per_row_vmem)
    tm = max(8, (tm // 8) * 8)
    tm = min(tm, max(8, ((rows + 7) // 8) * 8))   # never bigger than (padded) rows
    return tm


def _fold_groups(features):
    """Lane-dense fold factor: g rows packed so features*g is a multiple of 128."""
    if features % 128 == 0:
        return 1
    g = 128 // math.gcd(features, 128)
    if features * g <= 512:            # keeps segb <= 1 MiB and the MXU cost small
        return g
    return 1


# ---------------------------------------------------------------------------
# Wrapper paths
# ---------------------------------------------------------------------------
def _layer_norm_last(x, gamma, beta, eps, vmem_limit, tile_budget):
    """Normalize over the last axis."""
    orig_shape = x.shape
    features = orig_shape[-1]
    rows = math.prod(orig_shape[:-1])
    dtype_bytes = jnp.dtype(x.dtype).itemsize
    x2d = x.reshape(rows, features)

    g = _fold_groups(features)

    if g > 1:
        lane_width = features * g
        rows_pad = ((rows + g - 1) // g) * g
        if rows_pad != rows:
            x2d = jnp.pad(x2d, ((0, rows_pad - rows), (0, 0)))
        rows_eff = rows_pad // g
        xk = x2d.reshape(rows_eff, lane_width)
        gk = jnp.tile(gamma, g).reshape(1, lane_width)
        bk = jnp.tile(beta, g).reshape(1, lane_width)
        # Block-diagonal ones matrix built ONCE (resident input), not per grid step.
        seg = jnp.arange(lane_width, dtype=jnp.int32) // features
        segb = (seg[:, None] == seg[None, :]).astype(jnp.float32)

        tm = _pick_row_tile(rows_eff, lane_width, dtype_bytes, tile_budget)
        kernel = functools.partial(_ln_folded_kernel, eps=eps, feat=features)
        # TODO(synk): sweep pipeline_mode=pl.Buffered(3) on the x input if an xprof
        # trace still shows exposed DMA at step boundaries.
        out = pl.pallas_call(
            kernel,
            out_shape=jax.ShapeDtypeStruct((rows_eff, lane_width), x.dtype),
            grid_spec=pltpu.PrefetchScalarGridSpec(
                num_scalar_prefetch=0,
                grid=(pl.cdiv(rows_eff, tm),),
                in_specs=[
                    pl.BlockSpec((tm, lane_width), lambda i: (i, 0)),
                    pl.BlockSpec((1, lane_width), lambda i: (0, 0)),    # gamma resident
                    pl.BlockSpec((1, lane_width), lambda i: (0, 0)),    # beta resident
                    pl.BlockSpec((lane_width, lane_width), lambda i: (0, 0)),  # segb
                ],
                out_specs=pl.BlockSpec((tm, lane_width), lambda i: (i, 0)),
            ),
            compiler_params=pltpu.CompilerParams(
                dimension_semantics=("parallel",),
                vmem_limit_bytes=vmem_limit,
            ),
        )(xk, gk, bk, segb)
        out = out.reshape(rows_pad, features)
        if rows_pad != rows:
            out = out[:rows]
        return out.reshape(orig_shape)

    # General lane path (features already a multiple of 128, or too wide to fold).
    lane_width = features
    gk = gamma.reshape(1, lane_width)
    bk = beta.reshape(1, lane_width)
    tm = _pick_row_tile(rows, lane_width, dtype_bytes, tile_budget)
    kernel = functools.partial(_ln_lane_kernel, eps=eps, feat=features)
    out = pl.pallas_call(
        kernel,
        out_shape=jax.ShapeDtypeStruct((rows, lane_width), x.dtype),
        grid_spec=pltpu.PrefetchScalarGridSpec(
            num_scalar_prefetch=0,
            grid=(pl.cdiv(rows, tm),),
            in_specs=[
                pl.BlockSpec((tm, lane_width), lambda i: (i, 0)),
                pl.BlockSpec((1, lane_width), lambda i: (0, 0)),
                pl.BlockSpec((1, lane_width), lambda i: (0, 0)),
            ],
            out_specs=pl.BlockSpec((tm, lane_width), lambda i: (i, 0)),
        ),
        compiler_params=pltpu.CompilerParams(
            dimension_semantics=("parallel",),
            vmem_limit_bytes=vmem_limit,
        ),
    )(x2d, gk, bk)
    return out.reshape(orig_shape)


def _layer_norm_axis(x, gamma, beta, eps, d, vmem_limit, tile_budget):
    """Normalize over a non-minor axis without HBM transposes: view as (B, C, L),
    reduce over the sublane axis (C), keep the original minor axis on the lanes."""
    shape = x.shape
    B = math.prod(shape[:d])
    C = shape[d]
    L = math.prod(shape[d + 1:])
    dtype_bytes = jnp.dtype(x.dtype).itemsize

    slab = C * L
    per_b_vmem = 2 * 2 * slab * dtype_bytes + 4 * slab * 4
    if per_b_vmem > tile_budget:
        # A single (C, L) slab would not fit VMEM: fall back to the transpose path.
        # TODO(synk): tile L inside an axis=-2 kernel instead of paying HBM transposes.
        xt = jnp.moveaxis(x, d, -1)
        out = _layer_norm_last(xt, gamma, beta, eps, vmem_limit, tile_budget)
        return jnp.moveaxis(out, -1, d)

    x3 = x.reshape(B, C, L)
    tb = max(1, min(B,
                    _TARGET_TILE_IN_BYTES // max(1, slab * dtype_bytes),
                    tile_budget // per_b_vmem))
    kernel = functools.partial(_ln_axis2_kernel, eps=eps, feat=C)
    out = pl.pallas_call(
        kernel,
        out_shape=jax.ShapeDtypeStruct((B, C, L), x.dtype),
        grid_spec=pltpu.PrefetchScalarGridSpec(
            num_scalar_prefetch=0,
            grid=(pl.cdiv(B, tb),),
            in_specs=[
                pl.BlockSpec((tb, C, L), lambda i: (i, 0, 0)),
                pl.BlockSpec((C, 1), lambda i: (0, 0)),     # gamma: sublane-aligned
                pl.BlockSpec((C, 1), lambda i: (0, 0)),     # beta: sublane-aligned
            ],
            out_specs=pl.BlockSpec((tb, C, L), lambda i: (i, 0, 0)),
        ),
        compiler_params=pltpu.CompilerParams(
            dimension_semantics=("parallel",),
            vmem_limit_bytes=vmem_limit,
        ),
    )(x3, gamma.reshape(C, 1), beta.reshape(C, 1))
    return out.reshape(shape)


def layer_norm(x, gamma, beta, *, eps=1e-5, dim=-1):
    """LayerNorm matching the reference module (unbiased variance over `dim`)."""
    ndim = x.ndim
    d = dim % ndim
    vmem_limit, tile_budget = _vmem_budget()
    if d == ndim - 1:
        return _layer_norm_last(x, gamma, beta, eps, vmem_limit, tile_budget)
    return _layer_norm_axis(x, gamma, beta, eps, d, vmem_limit, tile_budget)


# ---------------------------------------------------------------------------
# Pure-JAX reference (mirrors the torch module, incl. unbiased variance)
# ---------------------------------------------------------------------------
def _reference(x, gamma, beta, eps=1e-5, dim=-1):
    d = dim % x.ndim
    swap = d != x.ndim - 1
    if swap:
        x = jnp.swapaxes(x, d, -1)
    mean = jnp.mean(x, axis=-1, keepdims=True)
    var = jnp.var(x, axis=-1, keepdims=True, ddof=1)
    y = (x - mean) / jnp.sqrt(var + eps) * gamma + beta
    if swap:
        y = jnp.swapaxes(y, d, -1)
    return y


if __name__ == "__main__":
    key = jax.random.PRNGKey(0)
    k1, k2, k3, k4 = jax.random.split(key, 4)

    # Case 1: small feature dim (lane-dense folded path, g=4, lane_width=128).
    x1 = jax.random.normal(k1, (2, 8, 32), dtype=jnp.float32)
    gamma1 = jnp.ones((32,), dtype=jnp.float32)
    beta1 = jnp.zeros((32,), dtype=jnp.float32)
    y1 = jax.block_until_ready(layer_norm(x1, gamma1, beta1, eps=1e-5))
    assert jnp.allclose(y1, _reference(x1, gamma1, beta1), atol=1e-5, rtol=1e-5)

    # Case 2: F multiple of 128 with a ragged row count (general lane path).
    feats = 256
    x2 = jax.random.normal(k2, (3, 5, feats), dtype=jnp.float32)
    gamma2 = jnp.linspace(0.5, 1.5, feats, dtype=jnp.float32)
    beta2 = jnp.linspace(-0.25, 0.25, feats, dtype=jnp.float32)
    y2 = jax.block_until_ready(layer_norm(x2, gamma2, beta2, eps=1e-5))
    assert jnp.allclose(y2, _reference(x2, gamma2, beta2), atol=1e-5, rtol=1e-5)

    # Case 3: dim != -1 (sublane-reduce kernel, no HBM transposes).
    x3 = jax.random.normal(k3, (2, 32, 8), dtype=jnp.float32)
    gamma3 = jnp.linspace(0.75, 1.25, 32, dtype=jnp.float32)
    beta3 = jnp.linspace(-0.1, 0.1, 32, dtype=jnp.float32)
    y3 = jax.block_until_ready(layer_norm(x3, gamma3, beta3, eps=1e-5, dim=1))
    assert jnp.allclose(y3, _reference(x3, gamma3, beta3, dim=1), atol=1e-5, rtol=1e-5)

    # Case 4: F=48 (not a divisor of 128), rows % g != 0 -> broadened fold + row pad.
    x4 = jax.random.normal(k4, (2, 10, 48), dtype=jnp.float32)
    gamma4 = jnp.linspace(0.9, 1.1, 48, dtype=jnp.float32)
    beta4 = jnp.linspace(-0.05, 0.05, 48, dtype=jnp.float32)
    y4 = jax.block_until_ready(layer_norm(x4, gamma4, beta4, eps=1e-5))
    assert jnp.allclose(y4, _reference(x4, gamma4, beta4), atol=1e-4, rtol=1e-4)

    print("KERNEL_OK")
</pallas_src>

<mosaic_0001>
module attributes {stable_mosaic.version = 11 : i64} {
  func.func @_ln_folded_kernel(%arg0: i32, %arg1: memref<8x128xf32, #tpu.memory_space<vmem>>, %arg2: memref<1x128xf32, #tpu.memory_space<vmem>>, %arg3: memref<1x128xf32, #tpu.memory_space<vmem>>, %arg4: memref<128x128xf32, #tpu.memory_space<vmem>>, %arg5: memref<8x128xf32, #tpu.memory_space<vmem>>) attributes {dimension_semantics = [#tpu.dimension_semantics<parallel>], iteration_bounds = array<i64: 1>, scalar_prefetch = 0 : i64, scratch_operands = 0 : i64, tpu.core_type = #tpu.core_type<tc>, window_params = [{transform_indices = @transform_0, window_bounds = array<i64: 8, 128>}, {pipeline_mode = #tpu.pipeline_mode<synchronous>, transform_indices = @transform_1, window_bounds = array<i64: 1, 128>}, {pipeline_mode = #tpu.pipeline_mode<synchronous>, transform_indices = @transform_2, window_bounds = array<i64: 1, 128>}, {pipeline_mode = #tpu.pipeline_mode<synchronous>, transform_indices = @transform_3, window_bounds = array<i64: 128, 128>}, {transform_indices = @transform_4, window_bounds = array<i64: 8, 128>}]} {
    %c0 = arith.constant 0 : index
    %c0_0 = arith.constant 0 : index
    %0 = vector.load %arg1[%c0, %c0_0] : memref<8x128xf32, #tpu.memory_space<vmem>>, vector<8x128xf32>
    %c0_1 = arith.constant 0 : index
    %c0_2 = arith.constant 0 : index
    %1 = vector.load %arg4[%c0_1, %c0_2] : memref<128x128xf32, #tpu.memory_space<vmem>>, vector<128x128xf32>
    %cst = arith.constant dense<0.000000e+00> : vector<8x128xf32>
    %2 = tpu.matmul %0, %1, %cst {dimension_numbers = #tpu.dot_dimension_numbers<[1], [0], [0], [1], [0, 0, 1, 1], [], []>} : vector<8x128xf32>, vector<128x128xf32>, vector<8x128xf32> -> vector<8x128xf32>
    %cst_3 = arith.constant 3.200000e+01 : f32
    %3 = vector.broadcast %cst_3 : f32 to vector<8x128xf32>
    %4 = arith.divf %2, %3 : vector<8x128xf32>
    %5 = arith.subf %0, %4 : vector<8x128xf32>
    %6 = arith.mulf %5, %5 : vector<8x128xf32>
    %cst_4 = arith.constant dense<0.000000e+00> : vector<8x128xf32>
    %7 = tpu.matmul %6, %1, %cst_4 {dimension_numbers = #tpu.dot_dimension_numbers<[1], [0], [0], [1], [0, 0, 1, 1], [], []>} : vector<8x128xf32>, vector<128x128xf32>, vector<8x128xf32> -> vector<8x128xf32>
    %cst_5 = arith.constant 3.100000e+01 : f32
    %8 = vector.broadcast %cst_5 : f32 to vector<8x128xf32>
    %9 = arith.divf %7, %8 : vector<8x128xf32>
    %cst_6 = arith.constant 9.99999974E-6 : f32
    %10 = vector.broadcast %cst_6 : f32 to vector<8x128xf32>
    %11 = arith.addf %9, %10 : vector<8x128xf32>
    %12 = math.rsqrt %11 : vector<8x128xf32>
    %13 = arith.mulf %5, %12 : vector<8x128xf32>
    %c0_7 = arith.constant 0 : index
    %c0_8 = arith.constant 0 : index
    %14 = vector.load %arg2[%c0_7, %c0_8] : memref<1x128xf32, #tpu.memory_space<vmem>>, vector<1x128xf32>
    %15 = vector.broadcast %14 : vector<1x128xf32> to vector<8x128xf32>
    %16 = arith.mulf %13, %15 : vector<8x128xf32>
    %c0_9 = arith.constant 0 : index
    %c0_10 = arith.constant 0 : index
    %17 = vector.load %arg3[%c0_9, %c0_10] : memref<1x128xf32, #tpu.memory_space<vmem>>, vector<1x128xf32>
    %18 = vector.broadcast %17 : vector<1x128xf32> to vector<8x128xf32>
    %19 = arith.addf %16, %18 : vector<8x128xf32>
    %c0_11 = arith.constant 0 : index
    %c0_12 = arith.constant 0 : index
    %20 = vector.load %arg5[%c0_11, %c0_12] : memref<8x128xf32, #tpu.memory_space<vmem>>, vector<8x128xf32>
    tpu.vector_store %arg5[%c0_11, %c0_12], %19 {strides = array<i32>} : memref<8x128xf32, #tpu.memory_space<vmem>>, vector<8x128xf32>,
    return
  }
  func.func @transform_0(%arg0: i32) -> (i32, i32) {
    %c0_i32 = arith.constant 0 : i32
    %c0_i32_0 = arith.constant 0 : i32
    return %arg0, %c0_i32 : i32, i32
  }
  func.func @transform_1(%arg0: i32) -> (i32, i32) {
    %c0_i32 = arith.constant 0 : i32
    %c0_i32_0 = arith.constant 0 : i32
    %c0_i32_1 = arith.constant 0 : i32
    return %c0_i32, %c0_i32_0 : i32, i32
  }
  func.func @transform_2(%arg0: i32) -> (i32, i32) {
    %c0_i32 = arith.constant 0 : i32
    %c0_i32_0 = arith.constant 0 : i32
    %c0_i32_1 = arith.constant 0 : i32
    return %c0_i32, %c0_i32_0 : i32, i32
  }
  func.func @transform_3(%arg0: i32) -> (i32, i32) {
    %c0_i32 = arith.constant 0 : i32
    %c0_i32_0 = arith.constant 0 : i32
    %c0_i32_1 = arith.constant 0 : i32
    return %c0_i32, %c0_i32_0 : i32, i32
  }
  func.func @transform_4(%arg0: i32) -> (i32, i32) {
    %c0_i32 = arith.constant 0 : i32
    %c0_i32_0 = arith.constant 0 : i32
    return %arg0, %c0_i32 : i32, i32
  }
}

</mosaic_0001>

<llo_original>
// kernel: tpu_custom_call.1
$region0: #{tpu_custom_call.1}
  #allocation0 [shape = 'u32[]', space=smem, size = 0x4, offset = 0x4, fixed_abs, tag = 'smem constant byte address 0x4 - core index']
  #allocation1 [shape = 'u32[144,128]{1,0:T(1,128)}', space=vmem, size = 0x12000, scoped, tag = 'internal scratch']
  %s0 = inlined_call_operand.hbm [shape: f32[4,128], index: 0, kind: input, shape index: {}]
  %s1 = inlined_call_operand.vmem [shape: f32[1,128], index: 1, kind: input, shape index: {}]
  %s2 = inlined_call_operand.vmem [shape: f32[1,128], index: 2, kind: input, shape index: {}]
  %s3 = inlined_call_operand.hbm [shape: f32[128,128], index: 3, kind: input, shape index: {}]
  %s4 = inlined_call_operand.hbm [shape: f32[4,128], index: 4, kind: output, shape index: {}]
  %s5 = sld [smem:[#allocation0]]
  $region34: #{tpu_custom_call.1} parent=0
    _
  %s7 = ssub.s32 1, %s5
  %s8 = scalar_select 0, %s7, %s5
  $region1: #{tpu_custom_call.1} parent=0
    #allocation2 [shape = 'u8[4096]{0}', space=vmem, size = 0x1000, scoped, tag = 'input window, operand 0, single buffered']
    #allocation3 [shape = 's32[1]{0}', space=sflag, size = 0x4, scoped, tag = 'scoped memory for tpu_custom_call.1']
    #allocation4 [shape = 's32[1]{0}', space=sflag, size = 0x4, scoped, tag = 'scoped memory for tpu_custom_call.1']
    #allocation5 [shape = 'u8[65536]{0}', space=vmem, size = 0x10000, scoped, tag = 'input window, operand 3, single buffered']
    #allocation6 [shape = 's32[1]{0}', space=sflag, size = 0x4, scoped, tag = 'scoped memory for tpu_custom_call.1']
    #allocation7 [shape = 'u8[4096]{0}', space=vmem, size = 0x1000, scoped, tag = 'output window, operand 0, single buffered']
    %9 = vsyncpa [#allocation3], 0
    %10 = vsyncpa [#allocation6], 0
    %11 = vsyncpa [#allocation4], 0
    // Predicated region
    $region2: #{tpu_custom_call.1} parent=1 // pred_check
      _
    $region3: #{tpu_custom_call.1} parent=1 // pred_check_branch
      %13 = sbr.rel (0) target = $region5
    $region4: #{tpu_custom_call.1} parent=1 // pred_region
      %s15 = ssub.s32 128, 64
      %16 = vsyncadd [#allocation3], %s15
      %s17 = sshll.u32 [#allocation2], 4
      %s18 = int_to_ptr.vmem [resolvable:$true] %s17
      %23 = dma.hbm_to_vmem [thread:$0]  %s0, 64, %s18, [#allocation3], 64, 64, 4
    $region5: #{tpu_custom_call.1} parent=1 // pred_fallthru
      _
    // Predicated region
    $region6: #{tpu_custom_call.1} parent=1 // pred_check
      _
    $region7: #{tpu_custom_call.1} parent=1 // pred_check_branch
      %25 = sbr.rel (0) target = $region9
    $region8: #{tpu_custom_call.1} parent=1 // pred_region
      _
    $region9: #{tpu_custom_call.1} parent=1 // pred_fallthru
      _
    // Predicated region
    $region10: #{tpu_custom_call.1} parent=1 // pred_check
      _
    $region11: #{tpu_custom_call.1} parent=1 // pred_check_branch
      %27 = sbr.rel (0) target = $region13
    $region12: #{tpu_custom_call.1} parent=1 // pred_region
      _
    $region13: #{tpu_custom_call.1} parent=1 // pred_fallthru
      _
    // Predicated region
    $region14: #{tpu_custom_call.1} parent=1 // pred_check
      _
    $region15: #{tpu_custom_call.1} parent=1 // pred_check_branch
      %29 = sbr.rel (0) target = $region17
    $region16: #{tpu_custom_call.1} parent=1 // pred_region
      %s31 = ssub.s32 2048, 2048
      %32 = vsyncadd [#allocation6], %s31
      %s33 = sshll.u32 [#allocation5], 4
      %s34 = int_to_ptr.vmem [resolvable:$true] %s33
      %39 = dma.hbm_to_vmem [thread:$0]  %s3, 2048, %s34, [#allocation6], 128, 128, 8
    $region17: #{tpu_custom_call.1} parent=1 // pred_fallthru
      _
    // Predicated region
    $region18: #{tpu_custom_call.1} parent=1 // pred_check
      _
    $region19: #{tpu_custom_call.1} parent=1 // pred_check_branch
      %41 = sbr.rel (0) target = $region21
    $region20: #{tpu_custom_call.1} parent=1 // pred_region
      %42 = dma.done [#allocation3], 128
    $region21: #{tpu_custom_call.1} parent=1 // pred_fallthru
      _
    // Predicated region
    $region22: #{tpu_custom_call.1} parent=1 // pred_check
      _
    $region23: #{tpu_custom_call.1} parent=1 // pred_check_branch
      %44 = sbr.rel (0) target = $region25
    $region24: #{tpu_custom_call.1} parent=1 // pred_region
      %45 = dma.done [#allocation6], 2048
    $region25: #{tpu_custom_call.1} parent=1 // pred_fallthru
      _
    %v46 = vld [vmem:[#allocation2] sm:$0xff]
    %v47 = vld [vmem:[#allocation5] sm:$0xff]
    %v48 = vld [vmem:[#allocation5 + $0x8] sm:$0xff]
    %v49 = vld [vmem:[#allocation5 + $0x10] sm:$0xff]
    %v50 = vld [vmem:[#allocation5 + $0x18] sm:$0xff]
    %v51 = vld [vmem:[#allocation5 + $0x20] sm:$0xff]
    %v52 = vld [vmem:[#allocation5 + $0x28] sm:$0xff]
    %v53 = vld [vmem:[#allocation5 + $0x30] sm:$0xff]
    %v54 = vld [vmem:[#allocation5 + $0x38] sm:$0xff]
    %v55 = vld [vmem:[#allocation5 + $0x40] sm:$0xff]
    %v56 = vld [vmem:[#allocation5 + $0x48] sm:$0xff]
    %v57 = vld [vmem:[#allocation5 + $0x50] sm:$0xff]
    %v58 = vld [vmem:[#allocation5 + $0x58] sm:$0xff]
    %v59 = vld [vmem:[#allocation5 + $0x60] sm:$0xff]
    %v60 = vld [vmem:[#allocation5 + $0x68] sm:$0xff]
    %v61 = vld [vmem:[#allocation5 + $0x70] sm:$0xff]
    %v62 = vld [vmem:[#allocation5 + $0x78] sm:$0xff]
    %63 = vmatprep.subr.mxu0 0.0
    %64 = vmatpush1.msra.mxu0 %v47
    %65 = vmatprep.subr.mxu0 0.0
    %66 = vmatpush1.msra.mxu0 %v48
    %67 = vmatprep.subr.mxu0 0.0
    %68 = vmatpush1.msra.mxu0 %v49
    %69 = vmatprep.subr.mxu0 0.0
    %70 = vmatpush1.msra.mxu0 %v50
    %71 = vmatprep.subr.mxu0 0.0
    %72 = vmatpush1.msra.mxu0 %v51
    %73 = vmatprep.subr.mxu0 0.0
    %74 = vmatpush1.msra.mxu0 %v52
    %75 = vmatprep.subr.mxu0 0.0
    %76 = vmatpush1.msra.mxu0 %v53
    %77 = vmatprep.subr.mxu0 0.0
    %78 = vmatpush1.msra.mxu0 %v54
    %79 = vmatprep.subr.mxu0 0.0
    %80 = vmatpush1.msra.mxu0 %v55
    %81 = vmatprep.subr.mxu0 0.0
    %82 = vmatpush1.msra.mxu0 %v56
    %83 = vmatprep.subr.mxu0 0.0
    %84 = vmatpush1.msra.mxu0 %v57
    %85 = vmatprep.subr.mxu0 0.0
    %86 = vmatpush1.msra.mxu0 %v58
    %87 = vmatprep.subr.mxu0 0.0
    %88 = vmatpush1.msra.mxu0 %v59
    %89 = vmatprep.subr.mxu0 0.0
    %90 = vmatpush1.msra.mxu0 %v60
    %91 = vmatprep.subr.mxu0 0.0
    %92 = vmatpush1.msra.mxu0 %v61
    %93 = vmatprep.subr.mxu0 0.0
    %94 = vmatpush1.msra.mxu0 %v62
    %95 = vmatprep.subr.mxu0 0.0
    %96 = vmatpush1.msra.mxu0 0.0
    %97 = vmatprep.subr.mxu0 0.0
    %98 = vmatpush1.msra.mxu0 0.0
    %99 = vmatprep.subr.mxu0 0.0
    %100 = vmatpush1.msra.mxu0 0.0
    %101 = vmatprep.subr.mxu0 0.0
    %102 = vmatpush1.msra.mxu0 0.0
    %103 = vmatprep.subr.mxu0 0.0
    %104 = vmatpush1.msra.mxu0 0.0
    %105 = vmatprep.subr.mxu0 0.0
    %106 = vmatpush1.msra.mxu0 0.0
    %107 = vmatprep.subr.mxu0 0.0
    %108 = vmatpush1.msra.mxu0 0.0
    %109 = vmatprep.subr.mxu0 0.0
    %110 = vmatpush1.msra.mxu0 0.0
    %111 = vmatprep.subr.mxu0 0.0
    %112 = vmatpush1.msra.mxu0 0.0
    %113 = vmatprep.subr.mxu0 0.0
    %114 = vmatpush1.msra.mxu0 0.0
    %115 = vmatprep.subr.mxu0 0.0
    %116 = vmatpush1.msra.mxu0 0.0
    %117 = vmatprep.subr.mxu0 0.0
    %118 = vmatpush1.msra.mxu0 0.0
    %119 = vmatprep.subr.mxu0 0.0
    %120 = vmatpush1.msra.mxu0 0.0
    %121 = vmatprep.subr.mxu0 0.0
    %122 = vmatpush1.msra.mxu0 0.0
    %123 = vmatprep.subr.mxu0 0.0
    %124 = vmatpush1.msra.mxu0 0.0
    %125 = vmatprep.subr.mxu0 0.0
    %126 = vmatpush1.msra.mxu0 0.0
    %127 = vmatprep.mubr.f32.mxu0 0.0
    %128 = vmatmul.mubr.f32.gmra.mrb[0].mxu0 %v46
    %v129 = vpop.f32.mrb[0].mxu0
    %v130 = vadd.f32 0.0, %v129
    %v131 = vpop.f32.mrb[0].mxu0
    %132 = vdwg.mxu0
    %v133 = vrcp.pop 32.0
    %v134 = vmul.f32 %v130, %v133
    %v135 = vsub.f32 %v46, %v134
    %v136 = vmul.f32 %v135, %v135
    %137 = vmatprep.subr.mxu0 0.0
    %138 = vmatpush1.msra.mxu0 %v47
    %139 = vmatprep.subr.mxu0 0.0
    %140 = vmatpush1.msra.mxu0 %v48
    %141 = vmatprep.subr.mxu0 0.0
    %142 = vmatpush1.msra.mxu0 %v49
    %143 = vmatprep.subr.mxu0 0.0
    %144 = vmatpush1.msra.mxu0 %v50
    %145 = vmatprep.subr.mxu0 0.0
    %146 = vmatpush1.msra.mxu0 %v51
    %147 = vmatprep.subr.mxu0 0.0
    %148 = vmatpush1.msra.mxu0 %v52
    %149 = vmatprep.subr.mxu0 0.0
    %150 = vmatpush1.msra.mxu0 %v53
    %151 = vmatprep.subr.mxu0 0.0
    %152 = vmatpush1.msra.mxu0 %v54
    %153 = vmatprep.subr.mxu0 0.0
    %154 = vmatpush1.msra.mxu0 %v55
    %155 = vmatprep.subr.mxu0 0.0
    %156 = vmatpush1.msra.mxu0 %v56
    %157 = vmatprep.subr.mxu0 0.0
    %158 = vmatpush1.msra.mxu0 %v57
    %159 = vmatprep.subr.mxu0 0.0
    %160 = vmatpush1.msra.mxu0 %v58
    %161 = vmatprep.subr.mxu0 0.0
    %162 = vmatpush1.msra.mxu0 %v59
    %163 = vmatprep.subr.mxu0 0.0
    %164 = vmatpush1.msra.mxu0 %v60
    %165 = vmatprep.subr.mxu0 0.0
    %166 = vmatpush1.msra.mxu0 %v61
    %167 = vmatprep.subr.mxu0 0.0
    %168 = vmatpush1.msra.mxu0 %v62
    %169 = vmatprep.subr.mxu0 0.0
    %170 = vmatpush1.msra.mxu0 0.0
    %171 = vmatprep.subr.mxu0 0.0
    %172 = vmatpush1.msra.mxu0 0.0
    %173 = vmatprep.subr.mxu0 0.0
    %174 = vmatpush1.msra.mxu0 0.0
    %175 = vmatprep.subr.mxu0 0.0
    %176 = vmatpush1.msra.mxu0 0.0
    %177 = vmatprep.subr.mxu0 0.0
    %178 = vmatpush1.msra.mxu0 0.0
    %179 = vmatprep.subr.mxu0 0.0
    %180 = vmatpush1.msra.mxu0 0.0
    %181 = vmatprep.subr.mxu0 0.0
    %182 = vmatpush1.msra.mxu0 0.0
    %183 = vmatprep.subr.mxu0 0.0
    %184 = vmatpush1.msra.mxu0 0.0
    %185 = vmatprep.subr.mxu0 0.0
    %186 = vmatpush1.msra.mxu0 0.0
    %187 = vmatprep.subr.mxu0 0.0
    %188 = vmatpush1.msra.mxu0 0.0
    %189 = vmatprep.subr.mxu0 0.0
    %190 = vmatpush1.msra.mxu0 0.0
    %191 = vmatprep.subr.mxu0 0.0
    %192 = vmatpush1.msra.mxu0 0.0
    %193 = vmatprep.subr.mxu0 0.0
    %194 = vmatpush1.msra.mxu0 0.0
    %195 = vmatprep.subr.mxu0 0.0
    %196 = vmatpush1.msra.mxu0 0.0
    %197 = vmatprep.subr.mxu0 0.0
    %198 = vmatpush1.msra.mxu0 0.0
    %199 = vmatprep.subr.mxu0 0.0
    %200 = vmatpush1.msra.mxu0 0.0
    %201 = vmatprep.mubr.f32.mxu0 0.0
    %202 = vmatmul.mubr.f32.gmra.mrb[0].mxu0 %v136
    %v203 = vpop.f32.mrb[0].mxu0
    %v204 = vadd.f32 0.0, %v203
    %v205 = vpop.f32.mrb[0].mxu0
    %206 = vdwg.mxu0
    %v207 = vrcp.pop 31.0
    %v208 = vmul.f32 %v204, %v207
    %v209 = vadd.f32 %v208, 1e-05
    %v210 = vrsqrt.pop %v209
    %v211 = vmul.f32 %v135, %v210
    %v212 = vld [vmem:[%s1] sm:$0x1]
    %v214 = vlaneseq
    %v215 = vshrl.u32 %v214, 7
    %v216 = vsub.s32 0, %v215
    %v217 = vrot.slane %v212, %v216
    %v219 = vmul.f32 %v211, %v217
    %v220 = vld [vmem:[%s2] sm:$0x1]
    %v222 = vlaneseq
    %v223 = vshrl.u32 %v222, 7
    %v224 = vsub.s32 0, %v223
    %v225 = vrot.slane %v220, %v224
    %v227 = vadd.f32 %v219, %v225
    %228 = vst [vmem:[#allocation7] sm:$0xff] %v227
    // Predicated region
    $region26: #{tpu_custom_call.1} parent=1 // pred_check
      _
    $region27: #{tpu_custom_call.1} parent=1 // pred_check_branch
      %230 = sbr.rel (0) target = $region29
    $region28: #{tpu_custom_call.1} parent=1 // pred_region
      %s232 = ssub.s32 128, 64
      %233 = vsyncadd [#allocation4], %s232
      %s234 = sshll.u32 [#allocation7], 4
      %s235 = int_to_ptr.vmem [resolvable:$true] %s234
      %240 = dma.vmem_to_hbm [thread:$0]  %s235, 64, %s4, [#allocation4], 64, 64, 4
    $region29: #{tpu_custom_call.1} parent=1 // pred_fallthru
      _
    // Predicated region
    $region30: #{tpu_custom_call.1} parent=1 // pred_check
      _
    $region31: #{tpu_custom_call.1} parent=1 // pred_check_branch
      %242 = sbr.rel (0) target = $region33
    $region32: #{tpu_custom_call.1} parent=1 // pred_region
      %243 = dma.done [#allocation4], 128
    $region33: #{tpu_custom_call.1} parent=1 // pred_fallthru
      _
    %244 = vsyncpa [#allocation3], 1
    %245 = vsyncpa [#allocation6], 1
    %246 = vsyncpa [#allocation4], 1

</llo_original>
